<compile_context>
chip_gen: v6e
topology: v6e:2x2x1
jax: 0.10.0
libtpu: 0.0.40
codegen_flags: <defaults>
</compile_context>

<pallas_src>
import functools

import jax
import jax.numpy as jnp
from jax import lax
from jax.experimental import pallas as pl
from jax.experimental.pallas import tpu as pltpu


def _prototype_kernel(q_ref, k_ref,
                      s_ref, sm_ref, uq_ref, gl_ref, sl_ref,
                      acc_ref, tmax_ref, tsum_ref,
                      *, n_valid, tile_n, needs_mask):
    """One lane-dense tile of queries: emits all per-query outputs + tile partials."""
    k = k_ref[...]                 # (m, d)   prototypes (resident, tiny)
    qt = q_ref[...]                # (d, TN)  query tile, queries on lanes
    m = k.shape[0]
    d = qt.shape[0]

    # scores in transposed layout: s[i, n] = <keys_i, query_n> -> (m, TN), no transpose.
    s = lax.dot_general(k, qt, (((1,), (0,)), ((), ())),
                        preferred_element_type=jnp.float32)
    s_ref[...] = s                 # raw scores; softmax over queries is finished in XLA

    # ---- softmax over prototypes (torch dim=1): sublane reduction over m. ----
    smax = jnp.max(s, axis=0, keepdims=True)                 # (1, TN)
    e_m = jnp.exp(s - smax)
    inv_den = 1.0 / jnp.sum(e_m, axis=0, keepdims=True)      # divide once per column
    sm_t = e_m * inv_den                                     # (m, TN)
    sm_ref[...] = sm_t

    # ---- read(): concat_memory^T = keys^T @ sm; fused [q ; cm] output slab. ----
    cm_t = lax.dot_general(k, sm_t, (((0,), (0,)), ((), ())),
                           preferred_element_type=jnp.float32)    # (d, TN)
    uq_ref[:d, :] = qt
    uq_ref[d:, :] = cm_t

    # ---- top-1 / top-2 prototype per query (first-occurrence tie-break). ----
    row_ids = lax.broadcasted_iota(jnp.int32, s.shape, 0)
    idx1 = jnp.min(jnp.where(s == smax, row_ids, m), axis=0, keepdims=True)
    is_top1 = row_ids == idx1
    oh1 = is_top1.astype(jnp.float32)                        # (m, TN)
    s2 = jnp.where(is_top1, -jnp.inf, s)
    smax2 = jnp.max(s2, axis=0, keepdims=True)
    idx2 = jnp.min(jnp.where(s2 == smax2, row_ids, m), axis=0, keepdims=True)
    oh2 = (row_ids == idx2).astype(jnp.float32)

    # keys[idx] gathered on the MXU, kept transposed: (d, TN).
    pos_t = lax.dot_general(k, oh1, (((0,), (0,)), ((), ())),
                            preferred_element_type=jnp.float32)
    neg_t = lax.dot_general(k, oh2, (((0,), (0,)), ((), ())),
                            preferred_element_type=jnp.float32)

    # ---- gathering loss: elementwise MSE vs the nearest prototype. ----
    gl_ref[...] = (qt - pos_t) ** 2

    # ---- spreading loss: TripletMarginLoss(margin=1, p=2, eps=1e-6, 'none'). ----
    eps = 1e-6
    d_pos = jnp.sqrt(jnp.sum((qt - pos_t + eps) ** 2, axis=0, keepdims=True))
    d_neg = jnp.sqrt(jnp.sum((qt - neg_t + eps) ** 2, axis=0, keepdims=True))
    sl_ref[...] = jnp.maximum(d_pos - d_neg + 1.0, 0.0)       # (1, TN)

    # ---- per-tile softmax-over-queries stats + partial memory-update accumulator.
    #   query_update[i] = sum_{n: top1(n)==i} sq[n,i]/max_n' sq[n',i] * q[n]
    #                   = sum_n oh1[i,n] * exp(s[i,n] - colmax_i) * q[n]
    #   emitted flash-style relative to the TILE max; recombined in the wrapper. ----
    if needs_mask:
        i = pl.program_id(0)
        col = lax.broadcasted_iota(jnp.int32, (1, tile_n), 1)
        valid_here = jnp.minimum(n_valid - i * tile_n, tile_n)
        s_stats = jnp.where(col < valid_here, s, -jnp.inf)    # pad columns -> -inf
    else:
        s_stats = s
    tmax = jnp.max(s_stats, axis=1, keepdims=True)            # (m, 1) per-proto tile max
    e_w = jnp.exp(s_stats - tmax)                             # (m, TN), 0 on pad columns
    tsum = jnp.sum(e_w, axis=1, keepdims=True)                # (m, 1) per-proto tile sum
    w = oh1 * e_w
    acc_tile = lax.dot_general(w, qt, (((1,), (1,)), ((), ())),
                               preferred_element_type=jnp.float32)   # (m, d)
    acc_ref[0] = acc_tile
    tmax_ref[0] = tmax
    tsum_ref[0] = tsum


def _choose_tiling(n_cols, target):
    """Pick (tile_n, padded_n) with tile_n a multiple of 128 (lane-dense blocks)."""
    target = max(128, (target // 128) * 128)
    up128 = -(-n_cols // 128) * 128
    if up128 <= target:
        return up128, up128                          # one (possibly padded) tile
    # Prefer a lane-aligned divisor of N (no pad / no output-slice copies).
    best_div = 0
    for c in range(128, target + 1, 128):
        if n_cols % c == 0:
            best_div = c
    if best_div >= 512:
        return best_div, n_cols
    # Otherwise pad: pick the tile (>=512, <=target, multiple of 128) with least padding.
    best_tile, best_pad = target, (-n_cols) % target
    for c in range(512, target + 1, 128):
        pad = (-n_cols) % c
        if pad < best_pad or (pad == best_pad and c > best_tile):
            best_tile, best_pad = c, pad
    return best_tile, n_cols + best_pad


@functools.partial(jax.jit, static_argnames=("tile_n_target",))
def prototype_forward(query, keys, tile_n_target=2048):
    """Prototype.forward(query, keys, train=True) as a single tiled Pallas kernel.

    query: (dims, t, n) float32;  keys: (m, dims) float32.
    Returns (updated_query (2*dims, t, n), updated_memory (m, dims),
             softmax_score_query (t*n, m), softmax_score_memory (t*n, m),
             spreading_loss (t*n,), gathering_loss (t*n, dims)).
    """
    dims, t, n = query.shape
    m, d = keys.shape
    assert d == dims
    N = t * n

    # (dims, t, n) -> (d, N) is the natural layout of the input: pure reshape, no copy.
    q_t = query.reshape(d, N).astype(jnp.float32)
    k = keys.astype(jnp.float32)

    # Cap the tile so the double-buffered working set stays well inside every
    # generation's scoped-VMEM default (16 MiB on v5e is the tightest).
    rows_per_col = 4 * d + 2 * m + 1            # q + (s, sm, uq, gl, sl) rows
    bytes_per_col = 4 * rows_per_col
    vmem_budget = 10 * 1024 * 1024
    cap = max(128, (vmem_budget // (2 * bytes_per_col)) // 128 * 128)
    tile_n, n_pad = _choose_tiling(N, min(tile_n_target, cap))
    if n_pad != N:
        q_t = jnp.pad(q_t, ((0, 0), (0, n_pad - N)))
    num_tiles = n_pad // tile_n

    kernel = functools.partial(_prototype_kernel, n_valid=N, tile_n=tile_n,
                               needs_mask=(n_pad != N))

    def col_spec(rows):
        return pl.BlockSpec((rows, tile_n), lambda i: (0, i))

    out_shapes = (
        jax.ShapeDtypeStruct((m, n_pad), jnp.float32),          # raw scores^T
        jax.ShapeDtypeStruct((m, n_pad), jnp.float32),          # softmax_score_memory^T
        jax.ShapeDtypeStruct((2 * d, n_pad), jnp.float32),      # [query ; concat_memory]^T
        jax.ShapeDtypeStruct((d, n_pad), jnp.float32),          # gathering_loss^T
        jax.ShapeDtypeStruct((1, n_pad), jnp.float32),          # spreading_loss
        jax.ShapeDtypeStruct((num_tiles, m, d), jnp.float32),   # partial query_update
        jax.ShapeDtypeStruct((num_tiles, m, 1), jnp.float32),   # per-tile score col-max
        jax.ShapeDtypeStruct((num_tiles, m, 1), jnp.float32),   # per-tile sum-exp
    )
    out_specs = (
        col_spec(m), col_spec(m), col_spec(2 * d), col_spec(d), col_spec(1),
        pl.BlockSpec((1, m, d), lambda i: (i, 0, 0)),
        pl.BlockSpec((1, m, 1), lambda i: (i, 0, 0)),
        pl.BlockSpec((1, m, 1), lambda i: (i, 0, 0)),
    )
    in_specs = [
        pl.BlockSpec((d, tile_n), lambda i: (0, i)),   # query tile (lane-dense)
        pl.BlockSpec((m, d), lambda i: (0, 0)),        # keys (same tiny block each step)
    ]

    blk_bytes = 2 * bytes_per_col * tile_n + 4 * (m * d + num_tiles * 0 + m * (d + 2))
    vmem_limit = int(min(32 * 1024 * 1024, max(16 * 1024 * 1024, 3 * blk_bytes)))

    cost = pl.CostEstimate(
        flops=10 * n_pad * m * d,
        transcendentals=2 * n_pad * (m + 1),
        bytes_accessed=4 * (n_pad * rows_per_col + m * d + num_tiles * m * (d + 2)),
    )

    s_raw, sm_t, uq_t, gl_t, sl, acc_p, tmax_o, tsum_o = pl.pallas_call(
        kernel,
        out_shape=out_shapes,
        grid_spec=pltpu.PrefetchScalarGridSpec(
            num_scalar_prefetch=0,
            grid=(num_tiles,),
            in_specs=in_specs,
            out_specs=out_specs,
        ),
        compiler_params=pltpu.CompilerParams(
            # No cross-tile carried state -> the tile axis is truly parallel
            # (sharded across both TensorCores on v7x).
            dimension_semantics=("parallel",),
            vmem_limit_bytes=vmem_limit,
        ),
        cost_estimate=cost,
    )(q_t, k)

    # ---- tiny XLA epilogue: recombine per-tile partials (num_tiles x m values). ----
    tmax = tmax_o[:, :, 0]                                    # (T, m)
    tsum = tsum_o[:, :, 0]                                    # (T, m)
    M = jnp.max(tmax, axis=0)                                 # (m,) global col max
    scale = jnp.exp(tmax - M[None, :])                        # (T, m)
    L = jnp.sum(scale * tsum, axis=0)                         # (m,) global sum-exp
    query_update = jnp.einsum('tm,tmd->md', scale, acc_p,
                              precision=lax.Precision.HIGHEST)
    upd = query_update + k
    nrm = jnp.sqrt(jnp.sum(upd * upd, axis=1, keepdims=True))
    updated_memory = upd / jnp.maximum(nrm, 1e-12)            # F.normalize(dim=1)

    # softmax over queries (torch dim=0), finished here; fuses with slice + transpose.
    sq = (jnp.exp(s_raw[:, :N] - M[:, None]) / L[:, None]).T  # (N, m)
    sm = sm_t[:, :N].T                                        # (N, m)
    gl = gl_t[:, :N].T                                        # (N, d)
    spreading = sl[0, :N]                                     # (N,)
    # (2d, N) is already the module's final layout; just split N back into (t, n).
    updated_query = uq_t[:, :N].reshape(2 * d, t, n)

    return updated_query, updated_memory, sq, sm, spreading, gl


def _reference_forward(query, keys):
    """Pure-JAX reference of Prototype.forward(train=True) for self-validation."""
    dims, t, n = query.shape
    m, d = keys.shape
    N = t * n
    hi = lax.Precision.HIGHEST
    q = jnp.transpose(query, (1, 2, 0)).reshape(N, d)
    s = jnp.dot(q, keys.T, precision=hi)
    sq = jax.nn.softmax(s, axis=0)
    sm = jax.nn.softmax(s, axis=1)
    cm = jnp.dot(sm, keys, precision=hi)
    uq = jnp.concatenate([q, cm], axis=1).reshape(t, n, 2 * d).transpose(2, 0, 1)
    order = jnp.argsort(-s, axis=1)
    i1, i2 = order[:, 0], order[:, 1]
    pos, neg = keys[i1], keys[i2]
    gl = (q - pos) ** 2
    dp = jnp.sqrt(jnp.sum((q - pos + 1e-6) ** 2, axis=1))
    dn = jnp.sqrt(jnp.sum((q - neg + 1e-6) ** 2, axis=1))
    sl = jnp.maximum(dp - dn + 1.0, 0.0)
    oh1 = jax.nn.one_hot(i1, m, dtype=jnp.float32)
    w = oh1 * sq / jnp.max(sq, axis=0, keepdims=True)
    qu = jnp.dot(w.T, q, precision=hi)
    upd = qu + keys
    nrm = jnp.sqrt(jnp.sum(upd * upd, axis=1, keepdims=True))
    mem = upd / jnp.maximum(nrm, 1e-12)
    return uq, mem, sq, sm, sl, gl


if __name__ == "__main__":
    # small shapes: fea_dim=32, t=8, n=8, proto_size=8  (N = 64 query rows)
    dims, t, n, m = 32, 8, 8, 8
    key = jax.random.PRNGKey(0)
    kq, kk = jax.random.split(key)
    query = jax.random.normal(kq, (dims, t, n), dtype=jnp.float32)
    keys = jax.random.normal(kk, (m, dims), dtype=jnp.float32)

    outs = prototype_forward(query, keys)
    outs = jax.block_until_ready(outs)

    uq, mem, sq, sm, sl, gl = outs
    assert uq.shape == (2 * dims, t, n)
    assert mem.shape == (m, dims)
    assert sq.shape == (t * n, m) and sm.shape == (t * n, m)
    assert sl.shape == (t * n,) and gl.shape == (t * n, dims)

    # self-check against the pure-JAX reference
    ref = _reference_forward(query, keys)
    names = ("updated_query", "updated_memory", "softmax_score_query",
             "softmax_score_memory", "spreading_loss", "gathering_loss")
    for name, got, want in zip(names, outs, ref):
        assert got.shape == want.shape, name
        assert bool(jnp.allclose(got, want, rtol=1e-3, atol=1e-4)), \
            (name, float(jnp.max(jnp.abs(got - want))))

    print("KERNEL_OK")
</pallas_src>

<mosaic_0001>
module attributes {stable_mosaic.version = 11 : i64} {
  func.func @_prototype_kernel(%arg0: i32, %arg1: memref<32x128xf32, #tpu.memory_space<vmem>>, %arg2: memref<8x32xf32, #tpu.memory_space<vmem>>, %arg3: memref<8x128xf32, #tpu.memory_space<vmem>>, %arg4: memref<8x128xf32, #tpu.memory_space<vmem>>, %arg5: memref<64x128xf32, #tpu.memory_space<vmem>>, %arg6: memref<32x128xf32, #tpu.memory_space<vmem>>, %arg7: memref<1x128xf32, #tpu.memory_space<vmem>>, %arg8: memref<1x8x32xf32, #tpu.memory_space<vmem>>, %arg9: memref<1x8x1xf32, #tpu.memory_space<vmem>>, %arg10: memref<1x8x1xf32, #tpu.memory_space<vmem>>) attributes {dimension_semantics = [#tpu.dimension_semantics<parallel>], iteration_bounds = array<i64: 1>, scalar_prefetch = 0 : i64, scratch_operands = 0 : i64, tpu.core_type = #tpu.core_type<tc>, window_params = [{transform_indices = @transform_0, window_bounds = array<i64: 32, 128>}, {pipeline_mode = #tpu.pipeline_mode<synchronous>, transform_indices = @transform_1, window_bounds = array<i64: 8, 32>}, {transform_indices = @transform_2, window_bounds = array<i64: 8, 128>}, {transform_indices = @transform_3, window_bounds = array<i64: 8, 128>}, {transform_indices = @transform_4, window_bounds = array<i64: 64, 128>}, {transform_indices = @transform_5, window_bounds = array<i64: 32, 128>}, {transform_indices = @transform_6, window_bounds = array<i64: 1, 128>}, {transform_indices = @transform_7, window_bounds = array<i64: 1, 8, 32>}, {transform_indices = @transform_8, window_bounds = array<i64: 1, 8, 1>}, {transform_indices = @transform_9, window_bounds = array<i64: 1, 8, 1>}]} {
    %c0 = arith.constant 0 : index
    %c0_0 = arith.constant 0 : index
    %0 = vector.load %arg2[%c0, %c0_0] : memref<8x32xf32, #tpu.memory_space<vmem>>, vector<8x32xf32>
    %c0_1 = arith.constant 0 : index
    %c0_2 = arith.constant 0 : index
    %1 = vector.load %arg1[%c0_1, %c0_2] : memref<32x128xf32, #tpu.memory_space<vmem>>, vector<32x128xf32>
    %cst = arith.constant dense<0.000000e+00> : vector<8x128xf32>
    %2 = tpu.matmul %0, %1, %cst {dimension_numbers = #tpu.dot_dimension_numbers<[1], [0], [0], [1], [0, 0, 1, 1], [], []>} : vector<8x32xf32>, vector<32x128xf32>, vector<8x128xf32> -> vector<8x128xf32>
    %c0_3 = arith.constant 0 : index
    %c0_4 = arith.constant 0 : index
    %3 = vector.load %arg3[%c0_3, %c0_4] : memref<8x128xf32, #tpu.memory_space<vmem>>, vector<8x128xf32>
    tpu.vector_store %arg3[%c0_3, %c0_4], %2 {strides = array<i32>} : memref<8x128xf32, #tpu.memory_space<vmem>>, vector<8x128xf32>,
    %cst_5 = arith.constant dense<0xFF800000> : vector<128xf32>
    %4 = vector.multi_reduction <maximumf>, %2, %cst_5 [0] : vector<8x128xf32> to vector<128xf32>
    %5 = vector.shape_cast %4 : vector<128xf32> to vector<1x128xf32>
    %6 = vector.broadcast %5 : vector<1x128xf32> to vector<8x128xf32>
    %7 = arith.subf %2, %6 : vector<8x128xf32>
    %8 = math.exp %7 : vector<8x128xf32>
    %cst_6 = arith.constant dense<0.000000e+00> : vector<128xf32>
    %9 = vector.multi_reduction <add>, %8, %cst_6 [0] : vector<8x128xf32> to vector<128xf32>
    %10 = vector.shape_cast %9 : vector<128xf32> to vector<1x128xf32>
    %cst_7 = arith.constant 1.000000e+00 : f32
    %11 = vector.broadcast %cst_7 : f32 to vector<1x128xf32>
    %12 = arith.divf %11, %10 : vector<1x128xf32>
    %13 = vector.broadcast %12 : vector<1x128xf32> to vector<8x128xf32>
    %14 = arith.mulf %8, %13 : vector<8x128xf32>
    %c0_8 = arith.constant 0 : index
    %c0_9 = arith.constant 0 : index
    %15 = vector.load %arg4[%c0_8, %c0_9] : memref<8x128xf32, #tpu.memory_space<vmem>>, vector<8x128xf32>
    tpu.vector_store %arg4[%c0_8, %c0_9], %14 {strides = array<i32>} : memref<8x128xf32, #tpu.memory_space<vmem>>, vector<8x128xf32>,
    %cst_10 = arith.constant dense<0.000000e+00> : vector<32x128xf32>
    %16 = tpu.matmul %0, %14, %cst_10 {dimension_numbers = #tpu.dot_dimension_numbers<[0], [0], [1], [1], [0, 1, 1, 1], [], []>} : vector<8x32xf32>, vector<8x128xf32>, vector<32x128xf32> -> vector<32x128xf32>
    %c0_11 = arith.constant 0 : index
    %c0_12 = arith.constant 0 : index
    %17 = vector.load %arg5[%c0_11, %c0_12] : memref<64x128xf32, #tpu.memory_space<vmem>>, vector<32x128xf32>
    tpu.vector_store %arg5[%c0_11, %c0_12], %1 {strides = array<i32>} : memref<64x128xf32, #tpu.memory_space<vmem>>, vector<32x128xf32>,
    %c32 = arith.constant 32 : index
    %c0_13 = arith.constant 0 : index
    %18 = vector.load %arg5[%c32, %c0_13] : memref<64x128xf32, #tpu.memory_space<vmem>>, vector<32x128xf32>
    tpu.vector_store %arg5[%c32, %c0_13], %16 {strides = array<i32>} : memref<64x128xf32, #tpu.memory_space<vmem>>, vector<32x128xf32>,
    %19 = tpu.iota {dimensions = array<i32: 0>} : vector<8x128xi32>
    %20 = vector.broadcast %5 : vector<1x128xf32> to vector<8x128xf32>
    %21 = arith.cmpf oeq, %2, %20 : vector<8x128xf32>
    %c8_i32 = arith.constant 8 : i32
    %22 = vector.broadcast %c8_i32 : i32 to vector<8x128xi32>
    %23 = arith.select %21, %19, %22 : vector<8x128xi1>, vector<8x128xi32>
    %cst_14 = arith.constant dense<2147483647> : vector<128xi32>
    %24 = vector.multi_reduction <minsi>, %23, %cst_14 [0] : vector<8x128xi32> to vector<128xi32>
    %25 = vector.shape_cast %24 : vector<128xi32> to vector<1x128xi32>
    %26 = vector.broadcast %25 : vector<1x128xi32> to vector<8x128xi32>
    %27 = arith.cmpi eq, %19, %26 : vector<8x128xi32>
    %28 = arith.extui %27 : vector<8x128xi1> to vector<8x128xi32>
    %29 = arith.sitofp %28 : vector<8x128xi32> to vector<8x128xf32>
    %cst_15 = arith.constant 0xFF800000 : f32
    %30 = vector.broadcast %cst_15 : f32 to vector<8x128xf32>
    %31 = arith.select %27, %30, %2 : vector<8x128xi1>, vector<8x128xf32>
    %cst_16 = arith.constant dense<0xFF800000> : vector<128xf32>
    %32 = vector.multi_reduction <maximumf>, %31, %cst_16 [0] : vector<8x128xf32> to vector<128xf32>
    %33 = vector.shape_cast %32 : vector<128xf32> to vector<1x128xf32>
    %34 = vector.broadcast %33 : vector<1x128xf32> to vector<8x128xf32>
    %35 = arith.cmpf oeq, %31, %34 : vector<8x128xf32>
    %c8_i32_17 = arith.constant 8 : i32
    %36 = vector.broadcast %c8_i32_17 : i32 to vector<8x128xi32>
    %37 = arith.select %35, %19, %36 : vector<8x128xi1>, vector<8x128xi32>
    %cst_18 = arith.constant dense<2147483647> : vector<128xi32>
    %38 = vector.multi_reduction <minsi>, %37, %cst_18 [0] : vector<8x128xi32> to vector<128xi32>
    %39 = vector.shape_cast %38 : vector<128xi32> to vector<1x128xi32>
    %40 = vector.broadcast %39 : vector<1x128xi32> to vector<8x128xi32>
    %41 = arith.cmpi eq, %19, %40 : vector<8x128xi32>
    %42 = arith.extui %41 : vector<8x128xi1> to vector<8x128xi32>
    %43 = arith.sitofp %42 : vector<8x128xi32> to vector<8x128xf32>
    %cst_19 = arith.constant dense<0.000000e+00> : vector<32x128xf32>
    %44 = tpu.matmul %0, %29, %cst_19 {dimension_numbers = #tpu.dot_dimension_numbers<[0], [0], [1], [1], [0, 1, 1, 1], [], []>} : vector<8x32xf32>, vector<8x128xf32>, vector<32x128xf32> -> vector<32x128xf32>
    %cst_20 = arith.constant dense<0.000000e+00> : vector<32x128xf32>
    %45 = tpu.matmul %0, %43, %cst_20 {dimension_numbers = #tpu.dot_dimension_numbers<[0], [0], [1], [1], [0, 1, 1, 1], [], []>} : vector<8x32xf32>, vector<8x128xf32>, vector<32x128xf32> -> vector<32x128xf32>
    %46 = arith.subf %1, %44 : vector<32x128xf32>
    %47 = arith.mulf %46, %46 : vector<32x128xf32>
    %c0_21 = arith.constant 0 : index
    %c0_22 = arith.constant 0 : index
    %48 = vector.load %arg6[%c0_21, %c0_22] : memref<32x128xf32, #tpu.memory_space<vmem>>, vector<32x128xf32>
    tpu.vector_store %arg6[%c0_21, %c0_22], %47 {strides = array<i32>} : memref<32x128xf32, #tpu.memory_space<vmem>>, vector<32x128xf32>,
    %49 = arith.subf %1, %44 : vector<32x128xf32>
    %cst_23 = arith.constant 9.99999997E-7 : f32
    %50 = vector.broadcast %cst_23 : f32 to vector<32x128xf32>
    %51 = arith.addf %49, %50 : vector<32x128xf32>
    %52 = arith.mulf %51, %51 : vector<32x128xf32>
    %cst_24 = arith.constant dense<0.000000e+00> : vector<128xf32>
    %53 = vector.multi_reduction <add>, %52, %cst_24 [0] : vector<32x128xf32> to vector<128xf32>
    %54 = vector.shape_cast %53 : vector<128xf32> to vector<1x128xf32>
    %55 = math.sqrt %54 : vector<1x128xf32>
    %56 = arith.subf %1, %45 : vector<32x128xf32>
    %cst_25 = arith.constant 9.99999997E-7 : f32
    %57 = vector.broadcast %cst_25 : f32 to vector<32x128xf32>
    %58 = arith.addf %56, %57 : vector<32x128xf32>
    %59 = arith.mulf %58, %58 : vector<32x128xf32>
    %cst_26 = arith.constant dense<0.000000e+00> : vector<128xf32>
    %60 = vector.multi_reduction <add>, %59, %cst_26 [0] : vector<32x128xf32> to vector<128xf32>
    %61 = vector.shape_cast %60 : vector<128xf32> to vector<1x128xf32>
    %62 = math.sqrt %61 : vector<1x128xf32>
    %63 = arith.subf %55, %62 : vector<1x128xf32>
    %cst_27 = arith.constant 1.000000e+00 : f32
    %64 = vector.broadcast %cst_27 : f32 to vector<1x128xf32>
    %65 = arith.addf %63, %64 : vector<1x128xf32>
    %cst_28 = arith.constant 0.000000e+00 : f32
    %66 = vector.broadcast %cst_28 : f32 to vector<1x128xf32>
    %67 = arith.maximumf %65, %66 : vector<1x128xf32>
    %c0_29 = arith.constant 0 : index
    %c0_30 = arith.constant 0 : index
    %68 = vector.load %arg7[%c0_29, %c0_30] : memref<1x128xf32, #tpu.memory_space<vmem>>, vector<1x128xf32>
    tpu.vector_store %arg7[%c0_29, %c0_30], %67 {strides = array<i32>} : memref<1x128xf32, #tpu.memory_space<vmem>>, vector<1x128xf32>,
    %69 = tpu.iota {dimensions = array<i32: 1>} : vector<1x128xi32>
    %c128_i32 = arith.constant 128 : i32
    %70 = arith.muli %arg0, %c128_i32 : i32
    %c64_i32 = arith.constant 64 : i32
    %71 = arith.subi %c64_i32, %70 : i32
    %c128_i32_31 = arith.constant 128 : i32
    %72 = arith.minsi %71, %c128_i32_31 : i32
    %73 = vector.broadcast %72 : i32 to vector<1x128xi32>
    %74 = arith.cmpi slt, %69, %73 : vector<1x128xi32>
    %cst_32 = arith.constant 0xFF800000 : f32
    %75 = vector.shape_cast %74 : vector<1x128xi1> to vector<1x128xi1>
    %76 = vector.broadcast %75 : vector<1x128xi1> to vector<8x128xi1>
    %77 = vector.broadcast %cst_32 : f32 to vector<8x128xf32>
    %78 = arith.select %76, %2, %77 : vector<8x128xi1>, vector<8x128xf32>
    %cst_33 = arith.constant dense<0xFF800000> : vector<8xf32>
    %79 = vector.multi_reduction <maximumf>, %78, %cst_33 [1] : vector<8x128xf32> to vector<8xf32>
    %80 = vector.shape_cast %79 : vector<8xf32> to vector<8x1xf32>
    %81 = vector.broadcast %80 : vector<8x1xf32> to vector<8x128xf32>
    %82 = arith.subf %78, %81 : vector<8x128xf32>
    %83 = math.exp %82 : vector<8x128xf32>
    %cst_34 = arith.constant dense<0.000000e+00> : vector<8xf32>
    %84 = vector.multi_reduction <add>, %83, %cst_34 [1] : vector<8x128xf32> to vector<8xf32>
    %85 = vector.shape_cast %84 : vector<8xf32> to vector<8x1xf32>
    %86 = arith.mulf %29, %83 : vector<8x128xf32>
    %cst_35 = arith.constant dense<0.000000e+00> : vector<8x32xf32>
    %87 = tpu.matmul %86, %1, %cst_35 {dimension_numbers = #tpu.dot_dimension_numbers<[1], [1], [0], [0], [0, 0, 1, 0], [], []>} : vector<8x128xf32>, vector<32x128xf32>, vector<8x32xf32> -> vector<8x32xf32>
    %c0_36 = arith.constant 0 : index
    %c0_37 = arith.constant 0 : index
    %c0_38 = arith.constant 0 : index
    %88 = vector.load %arg8[%c0_36, %c0_37, %c0_38] : memref<1x8x32xf32, #tpu.memory_space<vmem>>, vector<1x8x32xf32>
    %89 = vector.shape_cast %88 : vector<1x8x32xf32> to vector<8x32xf32>
    %90 = vector.shape_cast %87 : vector<8x32xf32> to vector<1x8x32xf32>
    tpu.vector_store %arg8[%c0_36, %c0_37, %c0_38], %90 {strides = array<i32>} : memref<1x8x32xf32, #tpu.memory_space<vmem>>, vector<1x8x32xf32>,
    %c0_39 = arith.constant 0 : index
    %c0_40 = arith.constant 0 : index
    %c0_41 = arith.constant 0 : index
    %91 = vector.load %arg9[%c0_39, %c0_40, %c0_41] : memref<1x8x1xf32, #tpu.memory_space<vmem>>, vector<1x8x1xf32>
    %92 = vector.shape_cast %91 : vector<1x8x1xf32> to vector<8x1xf32>
    %93 = vector.shape_cast %80 : vector<8x1xf32> to vector<1x8x1xf32>
    tpu.vector_store %arg9[%c0_39, %c0_40, %c0_41], %93 {strides = array<i32>} : memref<1x8x1xf32, #tpu.memory_space<vmem>>, vector<1x8x1xf32>,
    %c0_42 = arith.constant 0 : index
    %c0_43 = arith.constant 0 : index
    %c0_44 = arith.constant 0 : index
    %94 = vector.load %arg10[%c0_42, %c0_43, %c0_44] : memref<1x8x1xf32, #tpu.memory_space<vmem>>, vector<1x8x1xf32>
    %95 = vector.shape_cast %94 : vector<1x8x1xf32> to vector<8x1xf32>
    %96 = vector.shape_cast %85 : vector<8x1xf32> to vector<1x8x1xf32>
    tpu.vector_store %arg10[%c0_42, %c0_43, %c0_44], %96 {strides = array<i32>} : memref<1x8x1xf32, #tpu.memory_space<vmem>>, vector<1x8x1xf32>,
    return
  }
  func.func @transform_0(%arg0: i32) -> (i32, i32) {
    %c0_i32 = arith.constant 0 : i32
    %c0_i32_0 = arith.constant 0 : i32
    return %c0_i32, %arg0 : i32, i32
  }
  func.func @transform_1(%arg0: i32) -> (i32, i32) {
    %c0_i32 = arith.constant 0 : i32
    %c0_i32_0 = arith.constant 0 : i32
    %c0_i32_1 = arith.constant 0 : i32
    return %c0_i32, %c0_i32_0 : i32, i32
  }
  func.func @transform_2(%arg0: i32) -> (i32, i32) {
    %c0_i32 = arith.constant 0 : i32
    %c0_i32_0 = arith.constant 0 : i32
    return %c0_i32, %arg0 : i32, i32
  }
  func.func @transform_3(%arg0: i32) -> (i32, i32) {
    %c0_i32 = arith.constant 0 : i32
    %c0_i32_0 = arith.constant 0 : i32
    return %c0_i32, %arg0 : i32, i32
  }
  func.func @transform_4(%arg0: i32) -> (i32, i32) {
    %c0_i32 = arith.constant 0 : i32
    %c0_i32_0 = arith.constant 0 : i32
    return %c0_i32, %arg0 : i32, i32
  }
  func.func @transform_5(%arg0: i32) -> (i32, i32) {
    %c0_i32 = arith.constant 0 : i32
    %c0_i32_0 = arith.constant 0 : i32
    return %c0_i32, %arg0 : i32, i32
  }
  func.func @transform_6(%arg0: i32) -> (i32, i32) {
    %c0_i32 = arith.constant 0 : i32
    %c0_i32_0 = arith.constant 0 : i32
    return %c0_i32, %arg0 : i32, i32
  }
  func.func @transform_7(%arg0: i32) -> (i32, i32, i32) {
    %c0_i32 = arith.constant 0 : i32
    %c0_i32_0 = arith.constant 0 : i32
    %c0_i32_1 = arith.constant 0 : i32
    return %arg0, %c0_i32, %c0_i32_0 : i32, i32, i32
  }
  func.func @transform_8(%arg0: i32) -> (i32, i32, i32) {
    %c0_i32 = arith.constant 0 : i32
    %c0_i32_0 = arith.constant 0 : i32
    %c0_i32_1 = arith.constant 0 : i32
    return %arg0, %c0_i32, %c0_i32_0 : i32, i32, i32
  }
  func.func @transform_9(%arg0: i32) -> (i32, i32, i32) {
    %c0_i32 = arith.constant 0 : i32
    %c0_i32_0 = arith.constant 0 : i32
    %c0_i32_1 = arith.constant 0 : i32
    return %arg0, %c0_i32, %c0_i32_0 : i32, i32, i32
  }
}

</mosaic_0001>

<llo_original>
// kernel: prototype_forward.1
$region0: #{prototype_forward.1}
  #allocation0 [shape = 'u32[]', space=smem, size = 0x4, offset = 0x4, fixed_abs, tag = 'smem constant byte address 0x4 - core index']
  #allocation1 [shape = 'u32[144,128]{1,0:T(1,128)}', space=vmem, size = 0x12000, scoped, tag = 'internal scratch']
  %s0 = inlined_call_operand.vmem [shape: f32[32,128], index: 0, kind: input, shape index: {}]
  %s1 = inlined_call_operand.vmem [shape: f32[8,32], index: 1, kind: input, shape index: {}]
  %s2 = inlined_call_operand.vmem [shape: f32[8,128], index: 2, kind: output, shape index: {0}]
  %s3 = inlined_call_operand.vmem [shape: f32[8,128], index: 3, kind: output, shape index: {1}]
  %s4 = inlined_call_operand.vmem [shape: f32[64,128], index: 4, kind: output, shape index: {2}]
  %s5 = inlined_call_operand.vmem [shape: f32[32,128], index: 5, kind: output, shape index: {3}]
  %s6 = inlined_call_operand.vmem [shape: f32[1,128], index: 6, kind: output, shape index: {4}]
  %s7 = inlined_call_operand.vmem [shape: f32[1,8,32], index: 7, kind: output, shape index: {5}]
  %s8 = inlined_call_operand.vmem [shape: f32[1,8,1], index: 8, kind: output, shape index: {6}]
  %s9 = inlined_call_operand.vmem [shape: f32[1,8,1], index: 9, kind: output, shape index: {7}]
  %10 = xla_tuple %s2, %s3, %s4, %s5, %s6, %s7, %s8, %s9
  %s11 = sld [smem:[#allocation0]]
  $region74: #{prototype_forward.1} parent=0
    _
  %s13 = ssub.s32 1, %s11
  %s14 = scalar_select 0, %s13, %s11
  // Predicated region
  $region2: #{prototype_forward.1} parent=0 // pred_check
    _
  $region3: #{prototype_forward.1} parent=0 // pred_check_branch
    %16 = sbr.rel (0) target = $region5
  $region4: #{prototype_forward.1} parent=0 // pred_region
    _
  $region5: #{prototype_forward.1} parent=0 // pred_fallthru
    _
  // Predicated region
  $region6: #{prototype_forward.1} parent=0 // pred_check
    _
  $region7: #{prototype_forward.1} parent=0 // pred_check_branch
    %18 = sbr.rel (0) target = $region9
  $region8: #{prototype_forward.1} parent=0 // pred_region
    _
  $region9: #{prototype_forward.1} parent=0 // pred_fallthru
    _
  %v19 = vld [vmem:[%s1] sm:$0xff]
  %v20 = vld [vmem:[%s0] sm:$0xff]
  %v21 = vld [vmem:[%s0 + $0x8] sm:$0xff]
  %v22 = vld [vmem:[%s0 + $0x10] sm:$0xff]
  %v23 = vld [vmem:[%s0 + $0x18] sm:$0xff]
  %vm24 = vcmask 261120
  %v26 = vsel %vm24, %v19, 0
  %28 = vmatprep.subr.mxu0 0.0
  %29 = vmatpush1.msra.mxu0 0.0
  %30 = vmatprep.subr.mxu0 0.0
  %31 = vmatpush1.msra.mxu0 0.0
  %32 = vmatprep.subr.mxu0 0.0
  %33 = vmatpush1.msra.mxu0 0.0
  %34 = vmatprep.subr.mxu0 0.0
  %35 = vmatpush1.msra.mxu0 0.0
  %36 = vmatprep.subr.mxu0 0.0
  %37 = vmatpush1.msra.mxu0 0.0
  %38 = vmatprep.subr.mxu0 0.0
  %39 = vmatpush1.msra.mxu0 0.0
  %40 = vmatprep.subr.mxu0 0.0
  %41 = vmatpush1.msra.mxu0 0.0
  %42 = vmatprep.subr.mxu0 0.0
  %43 = vmatpush1.msra.mxu0 0.0
  %44 = vmatprep.subr.mxu0 0.0
  %45 = vmatpush1.msra.mxu0 0.0
  %46 = vmatprep.subr.mxu0 0.0
  %47 = vmatpush1.msra.mxu0 0.0
  %48 = vmatprep.subr.mxu0 0.0
  %49 = vmatpush1.msra.mxu0 0.0
  %50 = vmatprep.subr.mxu0 0.0
  %51 = vmatpush1.msra.mxu0 0.0
  %52 = vmatprep.subr.mxu0 0.0
  %53 = vmatpush1.msra.mxu0 %v23
  %54 = vmatprep.subr.mxu0 0.0
  %55 = vmatpush1.msra.mxu0 %v22
  %56 = vmatprep.subr.mxu0 0.0
  %57 = vmatpush1.msra.mxu0 %v21
  %58 = vmatprep.subr.mxu0 0.0
  %59 = vmatpush1.msra.mxu0 %v20
  %60 = vmatprep.subr.mxu0 0.0
  %61 = vmatpush2.msra.mxu0 0.0
  %62 = vmatprep.subr.mxu0 0.0
  %63 = vmatpush2.msra.mxu0 0.0
  %64 = vmatprep.subr.mxu0 0.0
  %65 = vmatpush2.msra.mxu0 0.0
  %66 = vmatprep.subr.mxu0 0.0
  %67 = vmatpush2.msra.mxu0 0.0
  %68 = vmatprep.subr.mxu0 0.0
  %69 = vmatpush2.msra.mxu0 0.0
  %70 = vmatprep.subr.mxu0 0.0
  %71 = vmatpush2.msra.mxu0 0.0
  %72 = vmatprep.subr.mxu0 0.0
  %73 = vmatpush2.msra.mxu0 0.0
  %74 = vmatprep.subr.mxu0 0.0
  %75 = vmatpush2.msra.mxu0 0.0
  %76 = vmatprep.subr.mxu0 0.0
  %77 = vmatpush2.msra.mxu0 0.0
  %78 = vmatprep.subr.mxu0 0.0
  %79 = vmatpush2.msra.mxu0 0.0
  %80 = vmatprep.subr.mxu0 0.0
  %81 = vmatpush2.msra.mxu0 0.0
  %82 = vmatprep.subr.mxu0 0.0
  %83 = vmatpush2.msra.mxu0 0.0
  %84 = vmatprep.subr.mxu0 0.0
  %85 = vmatpush2.msra.mxu0 0.0
  %86 = vmatprep.subr.mxu0 0.0
  %87 = vmatpush2.msra.mxu0 0.0
  %88 = vmatprep.subr.mxu0 0.0
  %89 = vmatpush2.msra.mxu0 0.0
  %90 = vmatprep.subr.mxu0 0.0
  %91 = vmatpush2.msra.mxu0 0.0
  %92 = vmatprep.mubr.f32.mxu0 0.0
  %93 = vmatmul.mubr.f32.gmra.mxu0 %v26
  %v94 = vpop.f32.mrf.mxu0
  %v95 = vadd.f32 0.0, %v94
  %v96 = vpop.f32.mrf.mxu0
  %97 = vdwg.mxu0
  %98 = vst [vmem:[%s2] sm:$0xff] %v95
  %v99 = vrot.slane %v95, 4
  %v100 = vmax.f32 %v95, %v99
  %v101 = vrot.slane %v100, 2
  %v102 = vmax.f32 %v100, %v101
  %v103 = vrot.slane %v102, 1
  %v104 = vmax.f32 %v102, %v103
  %v105 = vsub.f32 %v95, %v104
  %v106 = vmul.f32 %v105, 1.442695
  %v107 = vpow.pop %v106
  %v108 = vrot.slane %v107, 4
  %v109 = vadd.f32 %v107, %v108
  %v110 = vrot.slane %v109, 2
  %v111 = vadd.f32 %v109, %v110
  %v112 = vrot.slane %v111, 1
  %v113 = vadd.f32 %v111, %v112
  %v114 = vrcp.pop %v113
  %v115 = vmul.f32 1.0, %v114
  %v116 = vmul.f32 %v107, %v115
  %117 = vst [vmem:[%s3] sm:$0xff] %v116
  %118 = vxpose.xlu0.b32.start [1/16] %v19, 128
  %119 = vxpose.xlu0.b32.cont [2/16] 0.0, 128
  %120 = vxpose.xlu0.b32.cont [3/16] 0.0, 128
  %121 = vxpose.xlu0.b32.cont [4/16] 0.0, 128
  %122 = vxpose.xlu0.b32.cont [5/16] 0.0, 128
  %123 = vxpose.xlu0.b32.cont [6/16] 0.0, 128
  %124 = vxpose.xlu0.b32.cont [7/16] 0.0, 128
  %125 = vxpose.xlu0.b32.cont [8/16] 0.0, 128
  %126 = vxpose.xlu0.b32.cont [9/16] 0.0, 128
  %127 = vxpose.xlu0.b32.cont [10/16] 0.0, 128
  %128 = vxpose.xlu0.b32.cont [11/16] 0.0, 128
  %129 = vxpose.xlu0.b32.cont [12/16] 0.0, 128
  %130 = vxpose.xlu0.b32.cont [13/16] 0.0, 128
  %131 = vxpose.xlu0.b32.cont [14/16] 0.0, 128
  %132 = vxpose.xlu0.b32.cont [15/16] 0.0, 128
  %133 = vxpose.xlu0.b32.end [16/16] 0.0, 128
  %v134 = vpop.trf.xlu0
  %v135 = vpop.trf.xlu0
  %v136 = vpop.trf.xlu0
  %v137 = vpop.trf.xlu0
  %v138 = vpop.trf.xlu0
  %v139 = vpop.trf.xlu0
  %v140 = vpop.trf.xlu0
  %v141 = vpop.trf.xlu0
  %v142 = vpop.trf.xlu0
  %v143 = vpop.trf.xlu0
  %v144 = vpop.trf.xlu0
  %v145 = vpop.trf.xlu0
  %v146 = vpop.trf.xlu0
  %v147 = vpop.trf.xlu0
  %v148 = vpop.trf.xlu0
  %v149 = vpop.trf.xlu0
  %vm150 = vcmask 64512
  %v152 = vsel %vm150, %v134, 0
  %v155 = vsel %vm150, %v135, 0
  %v158 = vsel %vm150, %v136, 0
  %v161 = vsel %vm150, %v137, 0
  %163 = vmatprep.subr.mxu0 0.0
  %164 = vmatpush1.msra.mxu0 0.0
  %165 = vmatprep.subr.mxu0 0.0
  %166 = vmatpush1.msra.mxu0 0.0
  %167 = vmatprep.subr.mxu0 0.0
  %168 = vmatpush1.msra.mxu0 0.0
  %169 = vmatprep.subr.mxu0 0.0
  %170 = vmatpush1.msra.mxu0 0.0
  %171 = vmatprep.subr.mxu0 0.0
  %172 = vmatpush1.msra.mxu0 0.0
  %173 = vmatprep.subr.mxu0 0.0
  %174 = vmatpush1.msra.mxu0 0.0
  %175 = vmatprep.subr.mxu0 0.0
  %176 = vmatpush1.msra.mxu0 0.0
  %177 = vmatprep.subr.mxu0 0.0
  %178 = vmatpush1.msra.mxu0 0.0
  %179 = vmatprep.subr.mxu0 0.0
  %180 = vmatpush1.msra.mxu0 0.0
  %181 = vmatprep.subr.mxu0 0.0
  %182 = vmatpush1.msra.mxu0 0.0
  %183 = vmatprep.subr.mxu0 0.0
  %184 = vmatpush1.msra.mxu0 0.0
  %185 = vmatprep.subr.mxu0 0.0
  %186 = vmatpush1.msra.mxu0 0.0
  %187 = vmatprep.subr.mxu0 0.0
  %188 = vmatpush1.msra.mxu0 0.0
  %189 = vmatprep.subr.mxu0 0.0
  %190 = vmatpush1.msra.mxu0 0.0
  %191 = vmatprep.subr.mxu0 0.0
  %192 = vmatpush1.msra.mxu0 0.0
  %193 = vmatprep.subr.mxu0 0.0
  %194 = vmatpush1.msra.mxu0 %v116
  %195 = vmatprep.subr.mxu0 0.0
  %196 = vmatpush2.msra.mxu0 0.0
  %197 = vmatprep.subr.mxu0 0.0
  %198 = vmatpush2.msra.mxu0 0.0
  %199 = vmatprep.subr.mxu0 0.0
  %200 = vmatpush2.msra.mxu0 0.0
  %201 = vmatprep.subr.mxu0 0.0
  %202 = vmatpush2.msra.mxu0 0.0
  %203 = vmatprep.subr.mxu0 0.0
  %204 = vmatpush2.msra.mxu0 0.0
  %205 = vmatprep.subr.mxu0 0.0
  %206 = vmatpush2.msra.mxu0 0.0
  %207 = vmatprep.subr.mxu0 0.0
  %208 = vmatpush2.msra.mxu0 0.0
  %209 = vmatprep.subr.mxu0 0.0
  %210 = vmatpush2.msra.mxu0 0.0
  %211 = vmatprep.subr.mxu0 0.0
  %212 = vmatpush2.msra.mxu0 0.0
  %213 = vmatprep.subr.mxu0 0.0
  %214 = vmatpush2.msra.mxu0 0.0
  %215 = vmatprep.subr.mxu0 0.0
  %216 = vmatpush2.msra.mxu0 0.0
  %217 = vmatprep.subr.mxu0 0.0
  %218 = vmatpush2.msra.mxu0 0.0
  %219 = vmatprep.subr.mxu0 0.0
  %220 = vmatpush2.msra.mxu0 0.0
  %221 = vmatprep.subr.mxu0 0.0
  %222 = vmatpush2.msra.mxu0 0.0
  %223 = vmatprep.subr.mxu0 0.0
  %224 = vmatpush2.msra.mxu0 0.0
  %225 = vmatprep.subr.mxu0 0.0
  %226 = vmatpush2.msra.mxu0 0.0
  %227 = vmatprep.mubr.f32.mxu0 0.0
  %228 = vmatmul.mubr.f32.gmra.mxu0 %v152
  %v229 = vpop.f32.mrf.mxu0
  %v230 = vadd.f32 0.0, %v229
  %v231 = vpop.f32.mrf.mxu0
  %232 = vmatprep.mubr.f32.mxu0 0.0
  %233 = vmatmul.mubr.f32.gmra.mxu0 %v155
  %v234 = vpop.f32.mrf.mxu0
  %v235 = vadd.f32 0.0, %v234
  %v236 = vpop.f32.mrf.mxu0
  %237 = vmatprep.mubr.f32.mxu0 0.0
  %238 = vmatmul.mubr.f32.gmra.mxu0 %v158
  %v239 = vpop.f32.mrf.mxu0
  %v240 = vadd.f32 0.0, %v239
  %v241 = vpop.f32.mrf.mxu0
  %242 = vmatprep.mubr.f32.mxu0 0.0
  %243 = vmatmul.mubr.f32.gmra.mxu0 %v161
  %v244 = vpop.f32.mrf.mxu0
  %v245 = vadd.f32 0.0, %v244
  %v246 = vpop.f32.mrf.mxu0
  %247 = vdwg.mxu0
  %248 = vst [vmem:[%s4] sm:$0xff] %v20
  %249 = vst [vmem:[%s4 + $0x8] sm:$0xff] %v21
  %250 = vst [vmem:[%s4 + $0x10] sm:$0xff] %v22
  %251 = vst [vmem:[%s4 + $0x18] sm:$0xff] %v23
  %252 = vst [vmem:[%s4 + $0x20] sm:$0xff] %v230
  %253 = vst [vmem:[%s4 + $0x28] sm:$0xff] %v235
  %254 = vst [vmem:[%s4 + $0x30] sm:$0xff] %v240
  %255 = vst [vmem:[%s4 + $0x38] sm:$0xff] %v245
  %v256 = vlaneseq
  %v257 = vshrl.u32 %v256, 7
  %vm258 = vcmp.eq.f32.partialorder %v95, %v104
  %v259 = vsel %vm258, %v257, 8
  %v260 = vrot.slane %v259, 4
  %vm261 = vcmp.lt.s32.totalorder %v259, %v260
  %v262 = vsel %vm261, %v259, %v260
  %v263 = vrot.slane %v262, 2
  %vm264 = vcmp.lt.s32.totalorder %v262, %v263
  %v265 = vsel %vm264, %v262, %v263
  %v266 = vrot.slane %v265, 1
  %vm267 = vcmp.lt.s32.totalorder %v265, %v266
  %v268 = vsel %vm267, %v265, %v266
  %vm269 = vcmp.eq.s32.totalorder %v257, %v268
  %v270 = vsel %vm269, 1, 0
  %v271 = vcvt.s32.f32 %v270
  %v272 = vsel %vm269, -inf, %v95
  %v273 = vrot.slane %v272, 4
  %v274 = vmax.f32 %v272, %v273
  %v275 = vrot.slane %v274, 2
  %v276 = vmax.f32 %v274, %v275
  %v277 = vrot.slane %v276, 1
  %v278 = vmax.f32 %v276, %v277
  %vm279 = vcmp.eq.f32.partialorder %v272, %v278
  %v280 = vsel %vm279, %v257, 8
  %v281 = vrot.slane %v280, 4
  %vm282 = vcmp.lt.s32.totalorder %v280, %v281
  %v283 = vsel %vm282, %v280, %v281
  %v284 = vrot.slane %v283, 2
  %vm285 = vcmp.lt.s32.totalorder %v283, %v284
  %v286 = vsel %vm285, %v283, %v284
  %v287 = vrot.slane %v286, 1
  %vm288 = vcmp.lt.s32.totalorder %v286, %v287
  %v289 = vsel %vm288, %v286, %v287
  %vm290 = vcmp.eq.s32.totalorder %v257, %v289
  %v291 = vsel %vm290, 1, 0
  %v292 = vcvt.s32.f32 %v291
  %293 = vmatprep.subr.mxu0 0.0
  %294 = vmatpush1.msra.mxu0 0.0
  %295 = vmatprep.subr.mxu0 0.0
  %296 = vmatpush1.msra.mxu0 0.0
  %297 = vmatprep.subr.mxu0 0.0
  %298 = vmatpush1.msra.mxu0 0.0
  %299 = vmatprep.subr.mxu0 0.0
  %300 = vmatpush1.msra.mxu0 0.0
  %301 = vmatprep.subr.mxu0 0.0
  %302 = vmatpush1.msra.mxu0 0.0
  %303 = vmatprep.subr.mxu0 0.0
  %304 = vmatpush1.msra.mxu0 0.0
  %305 = vmatprep.subr.mxu0 0.0
  %306 = vmatpush1.msra.mxu0 0.0
  %307 = vmatprep.subr.mxu0 0.0
  %308 = vmatpush1.msra.mxu0 0.0
  %309 = vmatprep.subr.mxu0 0.0
  %310 = vmatpush1.msra.mxu0 0.0
  %311 = vmatprep.subr.mxu0 0.0
  %312 = vmatpush1.msra.mxu0 0.0
  %313 = vmatprep.subr.mxu0 0.0
  %314 = vmatpush1.msra.mxu0 0.0
  %315 = vmatprep.subr.mxu0 0.0
  %316 = vmatpush1.msra.mxu0 0.0
  %317 = vmatprep.subr.mxu0 0.0
  %318 = vmatpush1.msra.mxu0 0.0
  %319 = vmatprep.subr.mxu0 0.0
  %320 = vmatpush1.msra.mxu0 0.0
  %321 = vmatprep.subr.mxu0 0.0
  %322 = vmatpush1.msra.mxu0 0.0
  %323 = vmatprep.subr.mxu0 0.0
  %324 = vmatpush1.msra.mxu0 %v271
  %325 = vmatprep.subr.mxu0 0.0
  %326 = vmatpush2.msra.mxu0 0.0
  %327 = vmatprep.subr.mxu0 0.0
  %328 = vmatpush2.msra.mxu0 0.0
  %329 = vmatprep.subr.mxu0 0.0
  %330 = vmatpush2.msra.mxu0 0.0
  %331 = vmatprep.subr.mxu0 0.0
  %332 = vmatpush2.msra.mxu0 0.0
  %333 = vmatprep.subr.mxu0 0.0
  %334 = vmatpush2.msra.mxu0 0.0
  %335 = vmatprep.subr.mxu0 0.0
  %336 = vmatpush2.msra.mxu0 0.0
  %337 = vmatprep.subr.mxu0 0.0
  %338 = vmatpush2.msra.mxu0 0.0
  %339 = vmatprep.subr.mxu0 0.0
  %340 = vmatpush2.msra.mxu0 0.0
  %341 = vmatprep.subr.mxu0 0.0
  %342 = vmatpush2.msra.mxu0 0.0
  %343 = vmatprep.subr.mxu0 0.0
  %344 = vmatpush2.msra.mxu0 0.0
  %345 = vmatprep.subr.mxu0 0.0
  %346 = vmatpush2.msra.mxu0 0.0
  %347 = vmatprep.subr.mxu0 0.0
  %348 = vmatpush2.msra.mxu0 0.0
  %349 = vmatprep.subr.mxu0 0.0
  %350 = vmatpush2.msra.mxu0 0.0
  %351 = vmatprep.subr.mxu0 0.0
  %352 = vmatpush2.msra.mxu0 0.0
  %353 = vmatprep.subr.mxu0 0.0
  %354 = vmatpush2.msra.mxu0 0.0
  %355 = vmatprep.subr.mxu0 0.0
  %356 = vmatpush2.msra.mxu0 0.0
  %357 = vmatprep.mubr.f32.mxu0 0.0
  %358 = vmatmul.mubr.f32.gmra.mxu0 %v152
  %v359 = vpop.f32.mrf.mxu0
  %v360 = vadd.f32 0.0, %v359
  %v361 = vpop.f32.mrf.mxu0
  %362 = vmatprep.mubr.f32.mxu0 0.0
  %363 = vmatmul.mubr.f32.gmra.mxu0 %v155
  %v364 = vpop.f32.mrf.mxu0
  %v365 = vadd.f32 0.0, %v364
  %v366 = vpop.f32.mrf.mxu0
  %367 = vmatprep.mubr.f32.mxu0 0.0
  %368 = vmatmul.mubr.f32.gmra.mxu0 %v158
  %v369 = vpop.f32.mrf.mxu0
  %v370 = vadd.f32 0.0, %v369
  %v371 = vpop.f32.mrf.mxu0
  %372 = vmatprep.mubr.f32.mxu0 0.0
  %373 = vmatmul.mubr.f32.gmra.mxu0 %v161
  %v374 = vpop.f32.mrf.mxu0
  %v375 = vadd.f32 0.0, %v374
  %v376 = vpop.f32.mrf.mxu0
  %377 = vdwg.mxu0
  %378 = vmatprep.subr.mxu0 0.0
  %379 = vmatpush1.msra.mxu0 0.0
  %380 = vmatprep.subr.mxu0 0.0
  %381 = vmatpush1.msra.mxu0 0.0
  %382 = vmatprep.subr.mxu0 0.0
  %383 = vmatpush1.msra.mxu0 0.0
  %384 = vmatprep.subr.mxu0 0.0
  %385 = vmatpush1.msra.mxu0 0.0
  %386 = vmatprep.subr.mxu0 0.0
  %387 = vmatpush1.msra.mxu0 0.0
  %388 = vmatprep.subr.mxu0 0.0
  %389 = vmatpush1.msra.mxu0 0.0
  %390 = vmatprep.subr.mxu0 0.0
  %391 = vmatpush1.msra.mxu0 0.0
  %392 = vmatprep.subr.mxu0 0.0
  %393 = vmatpush1.msra.mxu0 0.0
  %394 = vmatprep.subr.mxu0 0.0
  %395 = vmatpush1.msra.mxu0 0.0
  %396 = vmatprep.subr.mxu0 0.0
  %397 = vmatpush1.msra.mxu0 0.0
  %398 = vmatprep.subr.mxu0 0.0
  %399 = vmatpush1.msra.mxu0 0.0
  %400 = vmatprep.subr.mxu0 0.0
  %401 = vmatpush1.msra.mxu0 0.0
  %402 = vmatprep.subr.mxu0 0.0
  %403 = vmatpush1.msra.mxu0 0.0
  %404 = vmatprep.subr.mxu0 0.0
  %405 = vmatpush1.msra.mxu0 0.0
  %406 = vmatprep.subr.mxu0 0.0
  %407 = vmatpush1.msra.mxu0 0.0
  %408 = vmatprep.subr.mxu0 0.0
  %409 = vmatpush1.msra.mxu0 %v292
  %410 = vmatprep.subr.mxu0 0.0
  %411 = vmatpush2.msra.mxu0 0.0
  %412 = vmatprep.subr.mxu0 0.0
  %413 = vmatpush2.msra.mxu0 0.0
  %414 = vmatprep.subr.mxu0 0.0
  %415 = vmatpush2.msra.mxu0 0.0
  %416 = vmatprep.subr.mxu0 0.0
  %417 = vmatpush2.msra.mxu0 0.0
  %418 = vmatprep.subr.mxu0 0.0
  %419 = vmatpush2.msra.mxu0 0.0
  %420 = vmatprep.subr.mxu0 0.0
  %421 = vmatpush2.msra.mxu0 0.0
  %422 = vmatprep.subr.mxu0 0.0
  %423 = vmatpush2.msra.mxu0 0.0
  %424 = vmatprep.subr.mxu0 0.0
  %425 = vmatpush2.msra.mxu0 0.0
  %426 = vmatprep.subr.mxu0 0.0
  %427 = vmatpush2.msra.mxu0 0.0
  %428 = vmatprep.subr.mxu0 0.0
  %429 = vmatpush2.msra.mxu0 0.0
  %430 = vmatprep.subr.mxu0 0.0
  %431 = vmatpush2.msra.mxu0 0.0
  %432 = vmatprep.subr.mxu0 0.0
  %433 = vmatpush2.msra.mxu0 0.0
  %434 = vmatprep.subr.mxu0 0.0
  %435 = vmatpush2.msra.mxu0 0.0
  %436 = vmatprep.subr.mxu0 0.0
  %437 = vmatpush2.msra.mxu0 0.0
  %438 = vmatprep.subr.mxu0 0.0
  %439 = vmatpush2.msra.mxu0 0.0
  %440 = vmatprep.subr.mxu0 0.0
  %441 = vmatpush2.msra.mxu0 0.0
  %442 = vmatprep.mubr.f32.mxu0 0.0
  %443 = vmatmul.mubr.f32.gmra.mxu0 %v152
  %v444 = vpop.f32.mrf.mxu0
  %v445 = vadd.f32 0.0, %v444
  %v446 = vpop.f32.mrf.mxu0
  %447 = vmatprep.mubr.f32.mxu0 0.0
  %448 = vmatmul.mubr.f32.gmra.mxu0 %v155
  %v449 = vpop.f32.mrf.mxu0
  %v450 = vadd.f32 0.0, %v449
  %v451 = vpop.f32.mrf.mxu0
  %452 = vmatprep.mubr.f32.mxu0 0.0
  %453 = vmatmul.mubr.f32.gmra.mxu0 %v158
  %v454 = vpop.f32.mrf.mxu0
  %v455 = vadd.f32 0.0, %v454
  %v456 = vpop.f32.mrf.mxu0
  %457 = vmatprep.mubr.f32.mxu0 0.0
  %458 = vmatmul.mubr.f32.gmra.mxu0 %v161
  %v459 = vpop.f32.mrf.mxu0
  %v460 = vadd.f32 0.0, %v459
  %v461 = vpop.f32.mrf.mxu0
  %462 = vdwg.mxu0
  %v463 = vsub.f32 %v20, %v360
  %v464 = vsub.f32 %v21, %v365
  %v465 = vsub.f32 %v22, %v370
  %v466 = vsub.f32 %v23, %v375
  %v467 = vmul.f32 %v463, %v463
  %v468 = vmul.f32 %v464, %v464
  %v469 = vmul.f32 %v465, %v465
  %v470 = vmul.f32 %v466, %v466
  %471 = vst [vmem:[%s5] sm:$0xff] %v467
  %472 = vst [vmem:[%s5 + $0x8] sm:$0xff] %v468
  %473 = vst [vmem:[%s5 + $0x10] sm:$0xff] %v469
  %474 = vst [vmem:[%s5 + $0x18] sm:$0xff] %v470
  %v475 = vadd.f32 %v463, 1e-06
  %v476 = vadd.f32 %v464, 1e-06
  %v477 = vadd.f32 %v465, 1e-06
  %v478 = vadd.f32 %v466, 1e-06
  %v479 = vmul.f32 %v475, %v475
  %v480 = vmul.f32 %v476, %v476
  %v481 = vmul.f32 %v477, %v477
  %v482 = vmul.f32 %v478, %v478
  %v483 = vadd.f32 %v479, %v480
  %v484 = vadd.f32 %v483, %v481
  %v485 = vadd.f32 %v484, %v482
  %v486 = vrot.slane %v485, 4
  %v487 = vadd.f32 %v485, %v486
  %v488 = vrot.slane %v487, 2
  %v489 = vadd.f32 %v487, %v488
  %v490 = vrot.slane %v489, 1
  %v491 = vadd.f32 %v489, %v490
  %v492 = vrsqrt.pop %v491
  %v493 = vmul.f32 %v491, %v492
  %vm494 = vcmp.eq.f32.partialorder %v491, inf
  %v495 = vsel %vm494, %v491, %v493
  %vm496 = vcmp.eq.f32.partialorder %v491, 0.0
  %v497 = vand.u32 %v491, 2147483648
  %v498 = vsel %vm496, %v497, %v495
  %v499 = vsub.f32 %v20, %v445
  %v500 = vsub.f32 %v21, %v450
  %v501 = vsub.f32 %v22, %v455
  %v502 = vsub.f32 %v23, %v460
  %v503 = vadd.f32 %v499, 1e-06
  %v504 = vadd.f32 %v500, 1e-06
  %v505 = vadd.f32 %v501, 1e-06
  %v506 = vadd.f32 %v502, 1e-06
  %v507 = vmul.f32 %v503, %v503
  %v508 = vmul.f32 %v504, %v504
  %v509 = vmul.f32 %v505, %v505
  %v510 = vmul.f32 %v506, %v506
  %v511 = vadd.f32 %v507, %v508
  %v512 = vadd.f32 %v511, %v509
  %v513 = vadd.f32 %v512, %v510
  %v514 = vrot.slane %v513, 4
  %v515 = vadd.f32 %v513, %v514
  %v516 = vrot.slane %v515, 2
  %v517 = vadd.f32 %v515, %v516
  %v518 = vrot.slane %v517, 1
  %v519 = vadd.f32 %v517, %v518
  %v520 = vrsqrt.pop %v519
  %v521 = vmul.f32 %v519, %v520
  %vm522 = vcmp.eq.f32.partialorder %v519, inf
  %v523 = vsel %vm522, %v519, %v521
  %vm524 = vcmp.eq.f32.partialorder %v519, 0.0
  %v525 = vand.u32 %v519, 2147483648
  %v526 = vsel %vm524, %v525, %v523
  %v527 = vsub.f32 %v498, %v526
  %v528 = vadd.f32 %v527, 1.0
  %v529 = vmax.f32 %v528, 0.0
  %530 = vst [vmem:[%s6] sm:$0x1] %v529
  %v531 = vlaneseq
  %v532 = vand.u32 %v531, 127
  %s533 = smul.u32 0, 128
  %s534 = ssub.s32 64, %s533
  %p535 = scmp.lt.s32.totalorder %s534, 128
  %s536 = scalar_select %p535, %s534, 128
  %v537 = vstv %s536
  %vm538 = vcmp.lt.s32.totalorder %v532, %v537
  %v539 = vsel %vm538, 1, 0
  %vm540 = vcmp.eq.s32.totalorder %v539, 1
  %v541 = vsel %vm540, %v95, -inf
  %542 = vmax.xlane.f32.xlu0 %v541
  %v543 = vpop.xlane.xlu0 %542
  %v544 = vsub.f32 %v541, %v543
  %v545 = vmul.f32 %v544, 1.442695
  %v546 = vpow.pop %v545
  %547 = vadd.xlane.f32.xlu0 %v546
  %v548 = vpop.xlane.xlu0 %547
  %v549 = vmul.f32 %v271, %v546
  %550 = vmatprep.subr.mxu0 0.0
  %551 = vmatpush1.xpose.msra.mxu0 0.0
  %552 = vmatprep.subr.mxu0 0.0
  %553 = vmatpush1.xpose.msra.mxu0 0.0
  %554 = vmatprep.subr.mxu0 0.0
  %555 = vmatpush1.xpose.msra.mxu0 0.0
  %556 = vmatprep.subr.mxu0 0.0
  %557 = vmatpush1.xpose.msra.mxu0 0.0
  %558 = vmatprep.subr.mxu0 0.0
  %559 = vmatpush1.xpose.msra.mxu0 0.0
  %560 = vmatprep.subr.mxu0 0.0
  %561 = vmatpush1.xpose.msra.mxu0 0.0
  %562 = vmatprep.subr.mxu0 0.0
  %563 = vmatpush1.xpose.msra.mxu0 0.0
  %564 = vmatprep.subr.mxu0 0.0
  %565 = vmatpush1.xpose.msra.mxu0 0.0
  %566 = vmatprep.subr.mxu0 0.0
  %567 = vmatpush1.xpose.msra.mxu0 0.0
  %568 = vmatprep.subr.mxu0 0.0
  %569 = vmatpush1.xpose.msra.mxu0 0.0
  %570 = vmatprep.subr.mxu0 0.0
  %571 = vmatpush1.xpose.msra.mxu0 0.0
  %572 = vmatprep.subr.mxu0 0.0
  %573 = vmatpush1.xpose.msra.mxu0 0.0
  %574 = vmatprep.subr.mxu0 0.0
  %575 = vmatpush1.xpose.msra.mxu0 %v23
  %576 = vmatprep.subr.mxu0 0.0
  %577 = vmatpush1.xpose.msra.mxu0 %v22
  %578 = vmatprep.subr.mxu0 0.0
  %579 = vmatpush1.xpose.msra.mxu0 %v21
  %580 = vmatprep.subr.mxu0 0.0
  %581 = vmatpush1.xpose.msra.mxu0 %v20
  %582 = vmatprep.subr.mxu0 0.0
  %583 = vmatpush2.xpose.msra.mxu0 0.0
  %584 = vmatprep.subr.mxu0 0.0
  %585 = vmatpush2.xpose.msra.mxu0 0.0
  %586 = vmatprep.subr.mxu0 0.0
  %587 = vmatpush2.xpose.msra.mxu0 0.0
  %588 = vmatprep.subr.mxu0 0.0
  %589 = vmatpush2.xpose.msra.mxu0 0.0
  %590 = vmatprep.subr.mxu0 0.0
  %591 = vmatpush2.xpose.msra.mxu0 0.0
  %592 = vmatprep.subr.mxu0 0.0
  %593 = vmatpush2.xpose.msra.mxu0 0.0
  %594 = vmatprep.subr.mxu0 0.0
  %595 = vmatpush2.xpose.msra.mxu0 0.0
  %596 = vmatprep.subr.mxu0 0.0
  %597 = vmatpush2.xpose.msra.mxu0 0.0
  %598 = vmatprep.subr.mxu0 0.0
  %599 = vmatpush2.xpose.msra.mxu0 0.0
  %600 = vmatprep.subr.mxu0 0.0
  %601 = vmatpush2.xpose.msra.mxu0 0.0
  %602 = vmatprep.subr.mxu0 0.0
  %603 = vmatpush2.xpose.msra.mxu0 0.0
  %604 = vmatprep.subr.mxu0 0.0
  %605 = vmatpush2.xpose.msra.mxu0 0.0
  %606 = vmatprep.subr.mxu0 0.0
  %607 = vmatpush2.xpose.msra.mxu0 0.0
  %608 = vmatprep.subr.mxu0 0.0
  %609 = vmatpush2.xpose.msra.mxu0 0.0
  %610 = vmatprep.subr.mxu0 0.0
  %611 = vmatpush2.xpose.msra.mxu0 0.0
  %612 = vmatprep.subr.mxu0 0.0
  %613 = vmatpush2.xpose.msra.mxu0 0.0
  %614 = vmatprep.mubr.f32.mxu0 0.0
  %615 = vmatmul.mubr.f32.gmra.mxu0 %v549
  %v616 = vpop.f32.mrf.mxu0
  %v617 = vadd.f32 0.0, %v616
  %v618 = vpop.f32.mrf.mxu0
  %619 = vdwg.mxu0
  %620 = vst.msk [vmem:[%s7] sm:$0xff] %vm24, %v617
  %vm621 = vcmask 7168
  %622 = vst.msk [vmem:[%s8] sm:$0xff] %vm621, %v543
  %623 = vst.msk [vmem:[%s9] sm:$0xff] %vm621, %v548
  // Predicated region
  $region10: #{prototype_forward.1} parent=0 // pred_check
    _
  $region11: #{prototype_forward.1} parent=0 // pred_check_branch
    %625 = sbr.rel (0) target = $region13
  $region12: #{prototype_forward.1} parent=0 // pred_region
    _
  $region13: #{prototype_forward.1} parent=0 // pred_fallthru
    _
  // Predicated region
  $region14: #{prototype_forward.1} parent=0 // pred_check
    _
  $region15: #{prototype_forward.1} parent=0 // pred_check_branch
    %627 = sbr.rel (0) target = $region17
  $region16: #{prototype_forward.1} parent=0 // pred_region
    _
  $region17: #{prototype_forward.1} parent=0 // pred_fallthru
    _
  // Predicated region
  $region18: #{prototype_forward.1} parent=0 // pred_check
    _
  $region19: #{prototype_forward.1} parent=0 // pred_check_branch
    %629 = sbr.rel (0) target = $region21
  $region20: #{prototype_forward.1} parent=0 // pred_region
    _
  $region21: #{prototype_forward.1} parent=0 // pred_fallthru
    _
  // Predicated region
  $region22: #{prototype_forward.1} parent=0 // pred_check
    _
  $region23: #{prototype_forward.1} parent=0 // pred_check_branch
    %631 = sbr.rel (0) target = $region25
  $region24: #{prototype_forward.1} parent=0 // pred_region
    _
  $region25: #{prototype_forward.1} parent=0 // pred_fallthru
    _
  // Predicated region
  $region26: #{prototype_forward.1} parent=0 // pred_check
    _
  $region27: #{prototype_forward.1} parent=0 // pred_check_branch
    %633 = sbr.rel (0) target = $region29
  $region28: #{prototype_forward.1} parent=0 // pred_region
    _
  $region29: #{prototype_forward.1} parent=0 // pred_fallthru
    _
  // Predicated region
  $region30: #{prototype_forward.1} parent=0 // pred_check
    _
  $region31: #{prototype_forward.1} parent=0 // pred_check_branch
    %635 = sbr.rel (0) target = $region33
  $region32: #{prototype_forward.1} parent=0 // pred_region
    _
  $region33: #{prototype_forward.1} parent=0 // pred_fallthru
    _
  // Predicated region
  $region34: #{prototype_forward.1} parent=0 // pred_check
    _
  $region35: #{prototype_forward.1} parent=0 // pred_check_branch
    %637 = sbr.rel (0) target = $region37
  $region36: #{prototype_forward.1} parent=0 // pred_region
    _
  $region37: #{prototype_forward.1} parent=0 // pred_fallthru
    _
  // Predicated region
  $region38: #{prototype_forward.1} parent=0 // pred_check
    _
  $region39: #{prototype_forward.1} parent=0 // pred_check_branch
    %639 = sbr.rel (0) target = $region41
  $region40: #{prototype_forward.1} parent=0 // pred_region
    _
  $region41: #{prototype_forward.1} parent=0 // pred_fallthru
    _
  // Predicated region
  $region42: #{prototype_forward.1} parent=0 // pred_check
    _
  $region43: #{prototype_forward.1} parent=0 // pred_check_branch
    %641 = sbr.rel (0) target = $region45
  $region44: #{prototype_forward.1} parent=0 // pred_region
    _
  $region45: #{prototype_forward.1} parent=0 // pred_fallthru
    _
  // Predicated region
  $region46: #{prototype_forward.1} parent=0 // pred_check
    _
  $region47: #{prototype_forward.1} parent=0 // pred_check_branch
    %643 = sbr.rel (0) target = $region49
  $region48: #{prototype_forward.1} parent=0 // pred_region
    _
  $region49: #{prototype_forward.1} parent=0 // pred_fallthru
    _
  // Predicated region
  $region50: #{prototype_forward.1} parent=0 // pred_check
    _
  $region51: #{prototype_forward.1} parent=0 // pred_check_branch
    %645 = sbr.rel (0) target = $region53
  $region52: #{prototype_forward.1} parent=0 // pred_region
    _
  $region53: #{prototype_forward.1} parent=0 // pred_fallthru
    _
  // Predicated region
  $region54: #{prototype_forward.1} parent=0 // pred_check
    _
  $region55: #{prototype_forward.1} parent=0 // pred_check_branch
    %647 = sbr.rel (0) target = $region57
  $region56: #{prototype_forward.1} parent=0 // pred_region
    _
  $region57: #{prototype_forward.1} parent=0 // pred_fallthru
    _
  // Predicated region
  $region58: #{prototype_forward.1} parent=0 // pred_check
    _
  $region59: #{prototype_forward.1} parent=0 // pred_check_branch
    %649 = sbr.rel (0) target = $region61
  $region60: #{prototype_forward.1} parent=0 // pred_region
    _
  $region61: #{prototype_forward.1} parent=0 // pred_fallthru
    _
  // Predicated region
  $region62: #{prototype_forward.1} parent=0 // pred_check
    _
  $region63: #{prototype_forward.1} parent=0 // pred_check_branch
    %651 = sbr.rel (0) target = $region65
  $region64: #{prototype_forward.1} parent=0 // pred_region
    _
  $region65: #{prototype_forward.1} parent=0 // pred_fallthru
    _
  // Predicated region
  $region66: #{prototype_forward.1} parent=0 // pred_check
    _
  $region67: #{prototype_forward.1} parent=0 // pred_check_branch
    %653 = sbr.rel (0) target = $region69
  $region68: #{prototype_forward.1} parent=0 // pred_region
    _
  $region69: #{prototype_forward.1} parent=0 // pred_fallthru
    _
  // Predicated region
  $region70: #{prototype_forward.1} parent=0 // pred_check
    _
  $region71: #{prototype_forward.1} parent=0 // pred_check_branch
    %655 = sbr.rel (0) target = $region73
  $region72: #{prototype_forward.1} parent=0 // pred_region
    _
  $region73: #{prototype_forward.1} parent=0 // pred_fallthru
    _

</llo_original>
